<compile_context>
chip_gen: v6e
topology: v6e:2x2x1
jax: 0.10.0
libtpu: 0.0.40
codegen_flags: <defaults>
</compile_context>

<pallas_src>
import functools

import jax
import jax.numpy as jnp
from jax.experimental import pallas as pl
from jax.experimental.pallas import tpu as pltpu

_LANE = 128
_SUBLANE = 8


def _round_up(x, m):
    return ((x + m - 1) // m) * m


def _vmem_budget_bytes():
    """Physical per-core VMEM minus headroom (fallback: v7x's 64 MiB)."""
    try:
        cap = int(pltpu.get_tpu_info().vmem_capacity_bytes)
    except Exception:
        cap = 64 << 20
    # v7x (64 MiB) -> 48 MiB budget; v5e/v6e (128 MiB) -> 112 MiB budget.
    return max(cap - (16 << 20), int(cap * 0.75))


def _largest_aligned_divisor(total, align, target):
    """Largest multiple of `align` dividing `total` (itself a multiple of
    `align`), not exceeding `target`."""
    cand = min((target // align) * align, total)
    while cand > align and total % cand != 0:
        cand -= align
    return max(cand, align)


def _choose_batch_tile(batch, target):
    """Batch tile: the whole batch (full-dim block, zero padding) if it fits a
    single tile, else a multiple-of-8 tile that minimizes row padding."""
    if batch <= target:
        return batch
    best_tb, best_pad = _SUBLANE, None
    for cand in range((target // _SUBLANE) * _SUBLANE, _SUBLANE - 1, -_SUBLANE):
        pad = (-batch) % cand
        if best_pad is None or pad < best_pad:
            best_tb, best_pad = cand, pad
        if pad == 0:
            break
    return best_tb


def _shrink_to_fit(tb, fits):
    """Halve the batch tile (kept 8-aligned) until the working set fits."""
    while tb > _SUBLANE and not fits(tb):
        tb = max(_SUBLANE, _round_up(tb // 2, _SUBLANE))
    return tb


# ----------------------------------------------------------------------------
# Kernels
# ----------------------------------------------------------------------------
def _logreg_resident_kernel(x_ref, w_ref, b_ref, o_ref, *, compute_dtype):
    """o = x @ W_scaled + b_scaled with the full W resident in VMEM."""
    x = x_ref[...]
    if x.dtype != compute_dtype:
        x = x.astype(compute_dtype)          # cast on VPU, hidden under DMA
    o_ref[...] = (jnp.dot(x, w_ref[...], preferred_element_type=jnp.float32)
                  + b_ref[...])


def _logreg_tiled_kernel(x_ref, w_ref, b_ref, o_ref, *, compute_dtype):
    """K/N-tiled matmul accumulating directly into the f32 output block."""
    @pl.when(pl.program_id(2) == 0)
    def _():
        # Bias (already pre-scaled by 1/temperature) seeds the accumulator,
        # so there is no finalize pass at the last k step.
        o_ref[...] = jnp.broadcast_to(b_ref[...], o_ref.shape)

    x = x_ref[...]
    if x.dtype != compute_dtype:
        x = x.astype(compute_dtype)
    o_ref[...] += jnp.dot(x, w_ref[...], preferred_element_type=jnp.float32)


# ----------------------------------------------------------------------------
# Wrapper
# ----------------------------------------------------------------------------
def logistic_regression_forward(x, W, b, temperature=0.1,
                                compute_dtype=jnp.bfloat16,
                                force_pallas=False, force_tiled=False):
    """(x @ W + b) / temperature via Pallas TPU kernels."""
    B, D = x.shape
    Dw, C = W.shape
    assert D == Dw and b.shape == (C,)

    inv_t = float(1.0 / temperature)
    compute_dtype = jnp.dtype(compute_dtype)

    # Small-shape bailout: a fused XLA dot beats pad + launch + DMA overhead.
    if not force_pallas and (B * D * C) <= (1 << 16):
        return (x @ W + b) * inv_t

    xbytes = jnp.dtype(x.dtype).itemsize
    wbytes = compute_dtype.itemsize
    budget = _vmem_budget_bytes()

    # Fold 1/temperature into W (f32, before any downcast) and into b.
    # TODO(synk): in a real model, precompute w_scaled/b_scaled once per
    # parameter update instead of per forward call.
    w_scaled = W.astype(jnp.float32) * inv_t
    if compute_dtype != jnp.dtype(jnp.float32):
        w_scaled = w_scaled.astype(compute_dtype)
    b_scaled = b.astype(jnp.float32) * inv_t

    C_pad = _round_up(C, _LANE)              # lane-dense output stores
    resident_w_bytes = 2 * D * C_pad * wbytes  # conservatively 2 buffers

    use_resident = (not force_tiled) and resident_w_bytes <= budget // 2

    if use_resident:
        # ------------------------- W-resident path --------------------------
        tb_target = 2048 if wbytes == 2 else 1024

        def fits(tb):
            return (2 * tb * D * xbytes + resident_w_bytes
                    + 2 * tb * C_pad * 4 + 2 * C_pad * 4) <= budget

        TB = _shrink_to_fit(_choose_batch_tile(B, tb_target), fits)
        B_pad = _round_up(B, TB)

        x_in = x
        if B_pad != B:                       # batch rows only; D never padded
            x_in = jnp.zeros((B_pad, D), x.dtype).at[:B, :].set(x)
        w_in = w_scaled
        if C_pad != C:
            w_in = jnp.zeros((D, C_pad), w_scaled.dtype).at[:, :C].set(w_scaled)
        b_in = jnp.zeros((1, C_pad), jnp.float32).at[0, :C].set(b_scaled)

        working = (2 * TB * D * xbytes + resident_w_bytes
                   + 2 * TB * C_pad * 4 + 2 * C_pad * 4)
        vmem_limit = int(min(max(working + (4 << 20), 32 << 20), budget))

        out = pl.pallas_call(
            functools.partial(_logreg_resident_kernel,
                              compute_dtype=compute_dtype),
            out_shape=jax.ShapeDtypeStruct((B_pad, C_pad), jnp.float32),
            grid_spec=pltpu.PrefetchScalarGridSpec(
                num_scalar_prefetch=0,
                grid=(B_pad // TB,),
                in_specs=[
                    pl.BlockSpec((TB, D), lambda i: (i, 0)),     # x tile
                    pl.BlockSpec((D, C_pad), lambda i: (0, 0)),  # W (resident)
                    pl.BlockSpec((1, C_pad), lambda i: (0, 0)),  # bias (resident)
                ],
                out_specs=pl.BlockSpec((TB, C_pad), lambda i: (i, 0)),
            ),
            compiler_params=pltpu.CompilerParams(
                dimension_semantics=("parallel",),
                vmem_limit_bytes=vmem_limit,
            ),
            cost_estimate=pl.CostEstimate(
                flops=2 * B_pad * D * C_pad,
                transcendentals=0,
                bytes_accessed=(B_pad * D * xbytes + D * C_pad * wbytes
                                + C_pad * 4 + B_pad * C_pad * 4),
            ),
        )(x_in, w_in, b_in)

    else:
        # ------------------------- K/N-tiled path ---------------------------
        D_pad = _round_up(D, _LANE)
        TK = _largest_aligned_divisor(D_pad, _LANE, 512)
        TN = _largest_aligned_divisor(C_pad, _LANE, 1024)
        tb_target = 2048 if wbytes == 2 else 1024

        def fits(tb):
            return (2 * tb * TK * xbytes + 2 * TK * TN * wbytes
                    + 2 * tb * TN * 4 + 2 * TN * 4) <= budget

        TB = _shrink_to_fit(_choose_batch_tile(B, tb_target), fits)
        B_pad = _round_up(B, TB)

        x_in = x
        if (B_pad, D_pad) != (B, D):
            x_in = jnp.zeros((B_pad, D_pad), x.dtype).at[:B, :D].set(x)
        w_in = w_scaled
        if (D_pad, C_pad) != (D, C):
            w_in = jnp.zeros((D_pad, C_pad),
                             w_scaled.dtype).at[:D, :C].set(w_scaled)
        b_in = jnp.zeros((1, C_pad), jnp.float32).at[0, :C].set(b_scaled)

        nB, nC, nK = B_pad // TB, C_pad // TN, D_pad // TK
        working = (2 * TB * TK * xbytes + 2 * TK * TN * wbytes
                   + 2 * TB * TN * 4 + 2 * TN * 4)
        vmem_limit = int(min(max(working + (4 << 20), 32 << 20), budget))

        out = pl.pallas_call(
            functools.partial(_logreg_tiled_kernel,
                              compute_dtype=compute_dtype),
            out_shape=jax.ShapeDtypeStruct((B_pad, C_pad), jnp.float32),
            grid_spec=pltpu.PrefetchScalarGridSpec(
                num_scalar_prefetch=0,
                grid=(nB, nC, nK),                      # reduction axis last
                in_specs=[
                    pl.BlockSpec((TB, TK), lambda i, j, k: (i, k)),  # x
                    pl.BlockSpec((TK, TN), lambda i, j, k: (k, j)),  # W
                    pl.BlockSpec((1, TN), lambda i, j, k: (0, j)),   # bias
                ],
                out_specs=pl.BlockSpec((TB, TN), lambda i, j, k: (i, j)),
            ),
            compiler_params=pltpu.CompilerParams(
                dimension_semantics=("parallel", "parallel", "arbitrary"),
                vmem_limit_bytes=vmem_limit,
            ),
            cost_estimate=pl.CostEstimate(
                flops=2 * B_pad * D_pad * C_pad,
                transcendentals=0,
                bytes_accessed=(nC * B_pad * D_pad * xbytes
                                + nB * D_pad * C_pad * wbytes
                                + C_pad * 4 + B_pad * C_pad * 4),
            ),
        )(x_in, w_in, b_in)

    if (B_pad, C_pad) != (B, C):
        out = out[:B, :C]
    return out


if __name__ == "__main__":
    key = jax.random.PRNGKey(0)
    k_x, k_w, k_x2, k_w2 = jax.random.split(key, 4)

    # ---- Module-scale shapes: LogisticRegression(input_dim=32, num_class=16).
    batch, input_dim, num_class = 8, 32, 16
    temperature = 0.1
    W = jax.random.normal(k_w, (input_dim, num_class), dtype=jnp.float32)
    b = jnp.zeros((num_class,), dtype=jnp.float32)
    x = jax.random.normal(k_x, (batch, input_dim), dtype=jnp.float32)

    ref = (x @ W + b) / temperature

    # f32 MXU feed (exact-semantics path); Pallas forced on despite tiny shape.
    out_f32 = jax.block_until_ready(
        logistic_regression_forward(x, W, b, temperature,
                                    compute_dtype=jnp.float32,
                                    force_pallas=True))
    assert out_f32.shape == (batch, num_class)
    assert jnp.allclose(out_f32, ref, atol=5e-4, rtol=5e-4)

    # bf16 MXU feed: reference uses the same folded + bf16-cast weights.
    Ws_b = (W * (1.0 / temperature)).astype(jnp.bfloat16).astype(jnp.float32)
    x_b = x.astype(jnp.bfloat16).astype(jnp.float32)
    ref_b = x_b @ Ws_b + b / temperature
    out_b16 = jax.block_until_ready(
        logistic_regression_forward(x, W, b, temperature,
                                    compute_dtype=jnp.bfloat16,
                                    force_pallas=True))
    assert out_b16.shape == (batch, num_class)
    assert jnp.allclose(out_b16, ref_b, atol=1e-2, rtol=1e-2)

    # Small-shape bailout path (plain fused XLA dot) agrees as well.
    out_bail = jax.block_until_ready(
        logistic_regression_forward(x, W, b, temperature,
                                    compute_dtype=jnp.float32))
    assert jnp.allclose(out_bail, ref, atol=5e-4, rtol=5e-4)

    # ---- Larger shape exercising the K/N-tiled accumulate-into-output path.
    B2, D2, C2 = 40, 1280, 2000
    W2 = jax.random.normal(k_w2, (D2, C2), dtype=jnp.float32) / jnp.sqrt(
        jnp.float32(D2))
    b2 = jnp.arange(C2, dtype=jnp.float32) * 1e-3
    x2 = jax.random.normal(k_x2, (B2, D2), dtype=jnp.float32)

    Ws2_b = (W2 * (1.0 / temperature)).astype(jnp.bfloat16).astype(jnp.float32)
    x2_b = x2.astype(jnp.bfloat16).astype(jnp.float32)
    ref2 = x2_b @ Ws2_b + b2 / temperature
    out2 = jax.block_until_ready(
        logistic_regression_forward(x2, W2, b2, temperature,
                                    compute_dtype=jnp.bfloat16,
                                    force_pallas=True, force_tiled=True))
    assert out2.shape == (B2, C2)
    assert jnp.allclose(out2, ref2, atol=5e-2, rtol=5e-3)

    print("KERNEL_OK")
</pallas_src>

<mosaic_0001>
module attributes {stable_mosaic.version = 11 : i64} {
  func.func @_logreg_resident_kernel(%arg0: i32, %arg1: memref<8x32xf32, #tpu.memory_space<vmem>>, %arg2: memref<32x128xf32, #tpu.memory_space<vmem>>, %arg3: memref<1x128xf32, #tpu.memory_space<vmem>>, %arg4: memref<8x128xf32, #tpu.memory_space<vmem>>) attributes {dimension_semantics = [#tpu.dimension_semantics<parallel>], iteration_bounds = array<i64: 1>, scalar_prefetch = 0 : i64, scratch_operands = 0 : i64, tpu.core_type = #tpu.core_type<tc>, window_params = [{transform_indices = @transform_0, window_bounds = array<i64: 8, 32>}, {pipeline_mode = #tpu.pipeline_mode<synchronous>, transform_indices = @transform_1, window_bounds = array<i64: 32, 128>}, {pipeline_mode = #tpu.pipeline_mode<synchronous>, transform_indices = @transform_2, window_bounds = array<i64: 1, 128>}, {transform_indices = @transform_3, window_bounds = array<i64: 8, 128>}]} {
    %c0 = arith.constant 0 : index
    %c0_0 = arith.constant 0 : index
    %0 = vector.load %arg1[%c0, %c0_0] : memref<8x32xf32, #tpu.memory_space<vmem>>, vector<8x32xf32>
    %c0_1 = arith.constant 0 : index
    %c0_2 = arith.constant 0 : index
    %1 = vector.load %arg2[%c0_1, %c0_2] : memref<32x128xf32, #tpu.memory_space<vmem>>, vector<32x128xf32>
    %cst = arith.constant dense<0.000000e+00> : vector<8x128xf32>
    %2 = tpu.matmul %0, %1, %cst {dimension_numbers = #tpu.dot_dimension_numbers<[1], [0], [0], [1], [0, 0, 1, 1], [], []>} : vector<8x32xf32>, vector<32x128xf32>, vector<8x128xf32> -> vector<8x128xf32>
    %c0_3 = arith.constant 0 : index
    %c0_4 = arith.constant 0 : index
    %3 = vector.load %arg3[%c0_3, %c0_4] : memref<1x128xf32, #tpu.memory_space<vmem>>, vector<1x128xf32>
    %4 = vector.broadcast %3 : vector<1x128xf32> to vector<8x128xf32>
    %5 = arith.addf %2, %4 : vector<8x128xf32>
    %c0_5 = arith.constant 0 : index
    %c0_6 = arith.constant 0 : index
    %6 = vector.load %arg4[%c0_5, %c0_6] : memref<8x128xf32, #tpu.memory_space<vmem>>, vector<8x128xf32>
    tpu.vector_store %arg4[%c0_5, %c0_6], %5 {strides = array<i32>} : memref<8x128xf32, #tpu.memory_space<vmem>>, vector<8x128xf32>,
    return
  }
  func.func @transform_0(%arg0: i32) -> (i32, i32) {
    %c0_i32 = arith.constant 0 : i32
    %c0_i32_0 = arith.constant 0 : i32
    return %arg0, %c0_i32 : i32, i32
  }
  func.func @transform_1(%arg0: i32) -> (i32, i32) {
    %c0_i32 = arith.constant 0 : i32
    %c0_i32_0 = arith.constant 0 : i32
    %c0_i32_1 = arith.constant 0 : i32
    return %c0_i32, %c0_i32_0 : i32, i32
  }
  func.func @transform_2(%arg0: i32) -> (i32, i32) {
    %c0_i32 = arith.constant 0 : i32
    %c0_i32_0 = arith.constant 0 : i32
    %c0_i32_1 = arith.constant 0 : i32
    return %c0_i32, %c0_i32_0 : i32, i32
  }
  func.func @transform_3(%arg0: i32) -> (i32, i32) {
    %c0_i32 = arith.constant 0 : i32
    %c0_i32_0 = arith.constant 0 : i32
    return %arg0, %c0_i32 : i32, i32
  }
}

</mosaic_0001>

<llo_original>
// kernel: tpu_custom_call.1
$region0: #{tpu_custom_call.1}
  #allocation0 [shape = 'u32[]', space=smem, size = 0x4, offset = 0x4, fixed_abs, tag = 'smem constant byte address 0x4 - core index']
  #allocation1 [shape = 'u32[144,128]{1,0:T(1,128)}', space=vmem, size = 0x12000, scoped, tag = 'internal scratch']
  %s0 = inlined_call_operand.hbm [shape: f32[8,32], index: 0, kind: input, shape index: {}]
  %s1 = inlined_call_operand.hbm [shape: f32[32,128], index: 1, kind: input, shape index: {}]
  %s2 = inlined_call_operand.vmem [shape: f32[1,128], index: 2, kind: input, shape index: {}]
  %s3 = inlined_call_operand.hbm [shape: f32[8,128], index: 3, kind: output, shape index: {}]
  %s4 = sld [smem:[#allocation0]]
  $region30: #{tpu_custom_call.1} parent=0
    _
  %s6 = ssub.s32 1, %s4
  %s7 = scalar_select 0, %s6, %s4
  $region1: #{tpu_custom_call.1} parent=0
    #allocation2 [shape = 'u8[4096]{0}', space=vmem, size = 0x1000, scoped, tag = 'input window, operand 0, single buffered']
    #allocation3 [shape = 's32[1]{0}', space=sflag, size = 0x4, scoped, tag = 'scoped memory for tpu_custom_call.1']
    #allocation4 [shape = 's32[1]{0}', space=sflag, size = 0x4, scoped, tag = 'scoped memory for tpu_custom_call.1']
    #allocation5 [shape = 'u8[16384]{0}', space=vmem, size = 0x4000, scoped, tag = 'input window, operand 1, single buffered']
    #allocation6 [shape = 's32[1]{0}', space=sflag, size = 0x4, scoped, tag = 'scoped memory for tpu_custom_call.1']
    #allocation7 [shape = 'u8[4096]{0}', space=vmem, size = 0x1000, scoped, tag = 'output window, operand 0, single buffered']
    %8 = vsyncpa [#allocation3], 0
    %9 = vsyncpa [#allocation6], 0
    %10 = vsyncpa [#allocation4], 0
    // Predicated region
    $region2: #{tpu_custom_call.1} parent=1 // pred_check
      _
    $region3: #{tpu_custom_call.1} parent=1 // pred_check_branch
      %12 = sbr.rel (0) target = $region5
    $region4: #{tpu_custom_call.1} parent=1 // pred_region
      %s14 = ssub.s32 128, 128
      %15 = vsyncadd [#allocation3], %s14
      %s17 = sshll.u32 [#allocation2], 4
      %s18 = int_to_ptr.vmem [resolvable:$true] %s17
      %20 = dma.hbm_to_vmem [thread:$0]  %s0, 128, %s18, [#allocation3]
    $region5: #{tpu_custom_call.1} parent=1 // pred_fallthru
      _
    // Predicated region
    $region6: #{tpu_custom_call.1} parent=1 // pred_check
      _
    $region7: #{tpu_custom_call.1} parent=1 // pred_check_branch
      %22 = sbr.rel (0) target = $region9
    $region8: #{tpu_custom_call.1} parent=1 // pred_region
      %s24 = ssub.s32 512, 512
      %25 = vsyncadd [#allocation6], %s24
      %s26 = sshll.u32 [#allocation5], 4
      %s27 = int_to_ptr.vmem [resolvable:$true] %s26
      %32 = dma.hbm_to_vmem [thread:$0]  %s1, 512, %s27, [#allocation6], 128, 128, 8
    $region9: #{tpu_custom_call.1} parent=1 // pred_fallthru
      _
    // Predicated region
    $region10: #{tpu_custom_call.1} parent=1 // pred_check
      _
    $region11: #{tpu_custom_call.1} parent=1 // pred_check_branch
      %34 = sbr.rel (0) target = $region13
    $region12: #{tpu_custom_call.1} parent=1 // pred_region
      _
    $region13: #{tpu_custom_call.1} parent=1 // pred_fallthru
      _
    // Predicated region
    $region14: #{tpu_custom_call.1} parent=1 // pred_check
      _
    $region15: #{tpu_custom_call.1} parent=1 // pred_check_branch
      %36 = sbr.rel (0) target = $region17
    $region16: #{tpu_custom_call.1} parent=1 // pred_region
      %37 = dma.done [#allocation3], 128
    $region17: #{tpu_custom_call.1} parent=1 // pred_fallthru
      _
    // Predicated region
    $region18: #{tpu_custom_call.1} parent=1 // pred_check
      _
    $region19: #{tpu_custom_call.1} parent=1 // pred_check_branch
      %39 = sbr.rel (0) target = $region21
    $region20: #{tpu_custom_call.1} parent=1 // pred_region
      %40 = dma.done [#allocation6], 512
    $region21: #{tpu_custom_call.1} parent=1 // pred_fallthru
      _
    %v41 = vld [vmem:[#allocation2] sm:$0xff]
    %v42 = vld [vmem:[#allocation5] sm:$0xff]
    %v43 = vld [vmem:[#allocation5 + $0x8] sm:$0xff]
    %v44 = vld [vmem:[#allocation5 + $0x10] sm:$0xff]
    %v45 = vld [vmem:[#allocation5 + $0x18] sm:$0xff]
    %v46 = vld [vmem:[%s2] sm:$0x1]
    %v48 = vlaneseq
    %v49 = vshrl.u32 %v48, 7
    %v50 = vsub.s32 0, %v49
    %v51 = vrot.slane %v46, %v50
    %vm53 = vcmask 261120
    %v55 = vsel %vm53, %v41, 0
    %57 = vmatprep.subr.mxu0 0.0
    %58 = vmatpush1.msra.mxu0 0.0
    %59 = vmatprep.subr.mxu0 0.0
    %60 = vmatpush1.msra.mxu0 0.0
    %61 = vmatprep.subr.mxu0 0.0
    %62 = vmatpush1.msra.mxu0 0.0
    %63 = vmatprep.subr.mxu0 0.0
    %64 = vmatpush1.msra.mxu0 0.0
    %65 = vmatprep.subr.mxu0 0.0
    %66 = vmatpush1.msra.mxu0 0.0
    %67 = vmatprep.subr.mxu0 0.0
    %68 = vmatpush1.msra.mxu0 0.0
    %69 = vmatprep.subr.mxu0 0.0
    %70 = vmatpush1.msra.mxu0 0.0
    %71 = vmatprep.subr.mxu0 0.0
    %72 = vmatpush1.msra.mxu0 0.0
    %73 = vmatprep.subr.mxu0 0.0
    %74 = vmatpush1.msra.mxu0 0.0
    %75 = vmatprep.subr.mxu0 0.0
    %76 = vmatpush1.msra.mxu0 0.0
    %77 = vmatprep.subr.mxu0 0.0
    %78 = vmatpush1.msra.mxu0 0.0
    %79 = vmatprep.subr.mxu0 0.0
    %80 = vmatpush1.msra.mxu0 0.0
    %81 = vmatprep.subr.mxu0 0.0
    %82 = vmatpush1.msra.mxu0 %v45
    %83 = vmatprep.subr.mxu0 0.0
    %84 = vmatpush1.msra.mxu0 %v44
    %85 = vmatprep.subr.mxu0 0.0
    %86 = vmatpush1.msra.mxu0 %v43
    %87 = vmatprep.subr.mxu0 0.0
    %88 = vmatpush1.msra.mxu0 %v42
    %89 = vmatprep.subr.mxu0 0.0
    %90 = vmatpush2.msra.mxu0 0.0
    %91 = vmatprep.subr.mxu0 0.0
    %92 = vmatpush2.msra.mxu0 0.0
    %93 = vmatprep.subr.mxu0 0.0
    %94 = vmatpush2.msra.mxu0 0.0
    %95 = vmatprep.subr.mxu0 0.0
    %96 = vmatpush2.msra.mxu0 0.0
    %97 = vmatprep.subr.mxu0 0.0
    %98 = vmatpush2.msra.mxu0 0.0
    %99 = vmatprep.subr.mxu0 0.0
    %100 = vmatpush2.msra.mxu0 0.0
    %101 = vmatprep.subr.mxu0 0.0
    %102 = vmatpush2.msra.mxu0 0.0
    %103 = vmatprep.subr.mxu0 0.0
    %104 = vmatpush2.msra.mxu0 0.0
    %105 = vmatprep.subr.mxu0 0.0
    %106 = vmatpush2.msra.mxu0 0.0
    %107 = vmatprep.subr.mxu0 0.0
    %108 = vmatpush2.msra.mxu0 0.0
    %109 = vmatprep.subr.mxu0 0.0
    %110 = vmatpush2.msra.mxu0 0.0
    %111 = vmatprep.subr.mxu0 0.0
    %112 = vmatpush2.msra.mxu0 0.0
    %113 = vmatprep.subr.mxu0 0.0
    %114 = vmatpush2.msra.mxu0 0.0
    %115 = vmatprep.subr.mxu0 0.0
    %116 = vmatpush2.msra.mxu0 0.0
    %117 = vmatprep.subr.mxu0 0.0
    %118 = vmatpush2.msra.mxu0 0.0
    %119 = vmatprep.subr.mxu0 0.0
    %120 = vmatpush2.msra.mxu0 0.0
    %121 = vmatprep.mubr.f32.mxu0 0.0
    %122 = vmatmul.mubr.f32.gmra.mxu0 %v55
    %v123 = vpop.f32.mrf.mxu0
    %v124 = vadd.f32 %v51, %v123
    %v125 = vpop.f32.mrf.mxu0
    %126 = vdwg.mxu0
    %127 = vst [vmem:[#allocation7] sm:$0xff] %v124
    // Predicated region
    $region22: #{tpu_custom_call.1} parent=1 // pred_check
      _
    $region23: #{tpu_custom_call.1} parent=1 // pred_check_branch
      %129 = sbr.rel (0) target = $region25
    $region24: #{tpu_custom_call.1} parent=1 // pred_region
      %s131 = ssub.s32 128, 128
      %132 = vsyncadd [#allocation4], %s131
      %s134 = sshll.u32 [#allocation7], 4
      %s135 = int_to_ptr.vmem [resolvable:$true] %s134
      %137 = dma.vmem_to_hbm [thread:$0]  %s135, 128, %s3, [#allocation4]
    $region25: #{tpu_custom_call.1} parent=1 // pred_fallthru
      _
    // Predicated region
    $region26: #{tpu_custom_call.1} parent=1 // pred_check
      _
    $region27: #{tpu_custom_call.1} parent=1 // pred_check_branch
      %139 = sbr.rel (0) target = $region29
    $region28: #{tpu_custom_call.1} parent=1 // pred_region
      %140 = dma.done [#allocation4], 128
    $region29: #{tpu_custom_call.1} parent=1 // pred_fallthru
      _
    %141 = vsyncpa [#allocation3], 1
    %142 = vsyncpa [#allocation6], 1
    %143 = vsyncpa [#allocation4], 1

</llo_original>
